<compile_context>
chip_gen: v5e
topology: v5e:2x2
jax: 0.10.0
libtpu: 0.0.40
codegen_flags: <defaults>
</compile_context>

<pallas_src>
import math

import jax
import jax.numpy as jnp
from jax.experimental import pallas as pl
from jax.experimental.pallas import tpu as pltpu


_MAX_UNROLL = 32   # static tree-max up to this many window rows
_LANE = 128


def _level_params(H, W, n):
    """Sizes matching nn.MaxPool2d(kernel=ceil(s/n), stride=floor(s/n))."""
    kh, kw = math.ceil(H / n), math.ceil(W / n)
    sh, sw = H // n, W // n
    if sh == 0 or sw == 0:
        raise ValueError(f"out_side {n} larger than spatial dims ({H},{W})")
    oh = (H - kh) // sh + 1
    ow = (W - kw) // sw + 1
    return kh, kw, sh, sw, oh, ow


def _round_up(x, m):
    return -(-x // m) * m


def _tree_max(vals):
    """Balanced pairwise max: log2(len) dependency depth, lets VALU co-issue."""
    vals = list(vals)
    while len(vals) > 1:
        nxt = [jnp.maximum(vals[k], vals[k + 1])
               for k in range(0, len(vals) - 1, 2)]
        if len(vals) % 2:
            nxt.append(vals[-1])
        vals = nxt
    return vals[0]


def _row_max(x_ref, r0, kh):
    """Elementwise max over x_ref[:, :, r0+d, :], d in range(kh) -> (b, c, W)."""
    if kh <= _MAX_UNROLL:
        return _tree_max(x_ref[:, :, r0 + d, :] for d in range(kh))

    # Long reduction chain: fori_loop fold (bounded live ranges / I-cache) with
    # two interleaved accumulators for a little ILP.
    def load(r):
        return x_ref[:, :, pl.ds(r, 1), :][:, :, 0, :]

    a0, a1 = load(r0), load(r0 + 1)

    def body(t, accs):
        u0, u1 = accs
        r = r0 + 2 * t
        return (jnp.maximum(u0, load(r)), jnp.maximum(u1, load(r + 1)))

    a0, a1 = jax.lax.fori_loop(1, kh // 2, body, (a0, a1))
    row = jnp.maximum(a0, a1)
    if kh % 2:
        row = jnp.maximum(row, load(r0 + kh - 1))
    return row


def _direct_level(x_ref, o_ref, params, capture):
    """Max-pool one pyramid level straight from the NCHW input block."""
    kh, kw, sh, sw, oh, ow = params
    vals = [] if capture else None
    for i in range(oh):                                   # oh = n (small)
        # Row pass on a full (b, c, W) slab: C on sublanes, W on lanes.
        row = _row_max(x_ref, i * sh, kh)
        row_vals = []
        for j in range(ow):
            # Column pass: one lane-axis reduce over the kw window columns.
            m = jnp.max(row[:, :, j * sw: j * sw + kw], axis=-1, keepdims=True)
            o_ref[:, :, i * ow + j: i * ow + j + 1] = m    # layout-matched store
            if capture:
                row_vals.append(m)
        if capture:
            vals.append(row_vals)
    return vals


def _derived_level(fin_vals, o_ref, n, r):
    """Derive a coarser level by maxing r x r blocks of the finest level."""
    for i in range(n):
        for j in range(n):
            parts = [fin_vals[i * r + a][j * r + b]
                     for a in range(r) for b in range(r)]
            o_ref[:, :, i * n + j: i * n + j + 1] = _tree_max(parts)


def _make_kernel(levels, plan, fin_idx):
    need_fin = any(mode == "derived" for mode, _ in plan)

    def kernel(x_ref, *o_refs):
        fin_vals = None
        # Direct levels first (finest one up front so derived levels reuse it).
        order = sorted(range(len(levels)), key=lambda k: k != fin_idx)
        for idx in order:
            mode, _ = plan[idx]
            if mode != "direct":
                continue
            capture = need_fin and idx == fin_idx
            vals = _direct_level(x_ref, o_refs[idx], levels[idx], capture)
            if capture:
                fin_vals = vals
        # Nested (derived) levels: tiny register-resident work.
        for idx in range(len(levels)):
            mode, r = plan[idx]
            if mode == "derived":
                _derived_level(fin_vals, o_refs[idx], levels[idx][4], r)

    return kernel


def _vmem_budget_bytes():
    """Total padded-VMEM budget for double-buffered blocks, per device gen."""
    try:
        kind = jax.devices()[0].device_kind.lower()
    except Exception:
        kind = ""
    if "v6" in kind or "v7" in kind:
        return 24 << 20     # comfortably under the 32 MiB scoped default
    return 12 << 20         # under the 16 MiB scoped default on v5e & older


def _pick_blocks(B, C, H, W, dtype, feat_sizes):
    item = jnp.dtype(dtype).itemsize
    sub = 8 * max(1, 4 // item)           # sublane tile (f32:8, bf16:16, int8:32)
    h_pad = _round_up(H, sub)
    w_pad = _round_up(W, _LANE)
    plane = h_pad * w_pad * item          # padded VMEM bytes of one (b, c) plane

    def footprint(b_blk, c_blk):
        inp = b_blk * c_blk * plane
        out = sum(b_blk * _round_up(c_blk, sub) * _round_up(f, _LANE) * item
                  for f in feat_sizes)
        return 2 * (inp + out)            # double-buffered in & out

    budget = _vmem_budget_bytes()
    b_blk, c_blk = B, C
    while footprint(b_blk, c_blk) > budget and b_blk > 1:
        b_blk = -(-b_blk // 2)
    while footprint(b_blk, c_blk) > budget and c_blk > sub:
        c_blk = max(sub, _round_up(-(-c_blk // 2), sub))
    # TODO(synk): add an H-split grid axis (running-max VMEM accumulators) for
    # spatial planes so large that even a (1, 8, H, W) block overflows VMEM.

    # Megacore: guarantee >= 2 blocks along a "parallel" axis when possible so
    # both v7x TensorCores get work.
    if pl.cdiv(B, b_blk) * pl.cdiv(C, c_blk) == 1:
        if B >= 2:
            b_blk = -(-B // 2)
        elif C >= 2 * sub:
            c_blk = _round_up(-(-C // 2), sub)
    return b_blk, c_blk


def spatial_pyramid_pool_2d(x, out_side):
    """Forward pass of SpatialPyramidPool2D.  x: (B, C, H, W), torch layout."""
    B, C, H, W = x.shape
    out_side = tuple(out_side)
    levels = tuple(_level_params(H, W, n) for n in out_side)
    feat_sizes = tuple(oh * ow for (_, _, _, _, oh, ow) in levels)

    # Nesting plan: derive coarser levels from the finest one whenever the
    # pooling windows nest exactly (H, W divisible by n_f and n | n_f).
    n_f = max(out_side)
    fin_idx = out_side.index(n_f)
    nestable = (H % n_f == 0) and (W % n_f == 0)
    plan = []
    for idx, n in enumerate(out_side):
        if nestable and idx != fin_idx and n_f % n == 0:
            plan.append(("derived", n_f // n))
        else:
            plan.append(("direct", None))

    b_blk, c_blk = _pick_blocks(B, C, H, W, x.dtype, feat_sizes)
    grid = (pl.cdiv(B, b_blk), pl.cdiv(C, c_blk))

    out_shape = tuple(jax.ShapeDtypeStruct((B, C, f), x.dtype) for f in feat_sizes)
    out_specs = tuple(
        pl.BlockSpec((b_blk, c_blk, f), lambda b, c: (b, c, 0)) for f in feat_sizes
    )

    outs = pl.pallas_call(
        _make_kernel(levels, plan, fin_idx),
        out_shape=out_shape,
        grid=grid,
        in_specs=[pl.BlockSpec((b_blk, c_blk, H, W), lambda b, c: (b, c, 0, 0))],
        out_specs=out_specs,
        compiler_params=pltpu.CompilerParams(
            dimension_semantics=("parallel", "parallel")),
    )(x)

    # (B, C, oh*ow) is already torch's channel-major flatten order, so
    # y.view(B, -1) is a pure reshape.  These tensors are tiny.
    feats = [o.reshape(B, C * f) for o, f in zip(outs, feat_sizes)]
    return jnp.concatenate(feats, axis=1)


def _reference_spp(x, out_side):
    """Pure-JAX reference (lax.reduce_window) for correctness checking."""
    B, C, H, W = x.shape
    outs = []
    for n in out_side:
        kh, kw, sh, sw, _, _ = _level_params(H, W, n)
        y = jax.lax.reduce_window(
            x, -jnp.inf, jax.lax.max,
            window_dimensions=(1, 1, kh, kw),
            window_strides=(1, 1, sh, sw),
            padding="VALID",
        )
        outs.append(y.reshape(B, -1))
    return jnp.concatenate(outs, axis=1)


if __name__ == "__main__":
    out_side = (1, 2, 4)
    key = jax.random.PRNGKey(0)
    x = jax.random.normal(key, (2, 4, 16, 16), dtype=jnp.float32)

    fn = jax.jit(lambda a: spatial_pyramid_pool_2d(a, out_side))
    y = jax.block_until_ready(fn(x))

    ref = _reference_spp(x, out_side)
    B, C, H, W = x.shape
    expected = C * sum(_level_params(H, W, n)[4] * _level_params(H, W, n)[5]
                       for n in out_side)
    assert y.shape == (B, expected), y.shape
    assert jnp.array_equal(y, ref), "mismatch vs reference"

    print("KERNEL_OK")
</pallas_src>

<mosaic_0001>
module attributes {stable_mosaic.version = 11 : i64} {
  func.func @kernel(%arg0: i32, %arg1: i32, %arg2: memref<1x4x16x16xf32, #tpu.memory_space<vmem>>, %arg3: memref<1x4x1xf32, #tpu.memory_space<vmem>>, %arg4: memref<1x4x4xf32, #tpu.memory_space<vmem>>, %arg5: memref<1x4x16xf32, #tpu.memory_space<vmem>>) attributes {dimension_semantics = [#tpu.dimension_semantics<parallel>, #tpu.dimension_semantics<parallel>], iteration_bounds = array<i64: 2, 1>, scalar_prefetch = 0 : i64, scratch_operands = 0 : i64, tpu.core_type = #tpu.core_type<tc>, window_params = [{transform_indices = @transform_0, window_bounds = array<i64: 1, 4, 16, 16>}, {transform_indices = @transform_1, window_bounds = array<i64: 1, 4, 1>}, {transform_indices = @transform_2, window_bounds = array<i64: 1, 4, 4>}, {transform_indices = @transform_3, window_bounds = array<i64: 1, 4, 16>}]} {
    %c0 = arith.constant 0 : index
    %c0_0 = arith.constant 0 : index
    %c0_1 = arith.constant 0 : index
    %c0_2 = arith.constant 0 : index
    %0 = vector.load %arg2[%c0, %c0_0, %c0_1, %c0_2] : memref<1x4x16x16xf32, #tpu.memory_space<vmem>>, vector<1x4x1x16xf32>
    %1 = vector.shape_cast %0 : vector<1x4x1x16xf32> to vector<1x4x16xf32>
    %c0_3 = arith.constant 0 : index
    %c0_4 = arith.constant 0 : index
    %c1 = arith.constant 1 : index
    %c0_5 = arith.constant 0 : index
    %2 = vector.load %arg2[%c0_3, %c0_4, %c1, %c0_5] : memref<1x4x16x16xf32, #tpu.memory_space<vmem>>, vector<1x4x1x16xf32>
    %3 = vector.shape_cast %2 : vector<1x4x1x16xf32> to vector<1x4x16xf32>
    %c0_6 = arith.constant 0 : index
    %c0_7 = arith.constant 0 : index
    %c2 = arith.constant 2 : index
    %c0_8 = arith.constant 0 : index
    %4 = vector.load %arg2[%c0_6, %c0_7, %c2, %c0_8] : memref<1x4x16x16xf32, #tpu.memory_space<vmem>>, vector<1x4x1x16xf32>
    %5 = vector.shape_cast %4 : vector<1x4x1x16xf32> to vector<1x4x16xf32>
    %c0_9 = arith.constant 0 : index
    %c0_10 = arith.constant 0 : index
    %c3 = arith.constant 3 : index
    %c0_11 = arith.constant 0 : index
    %6 = vector.load %arg2[%c0_9, %c0_10, %c3, %c0_11] : memref<1x4x16x16xf32, #tpu.memory_space<vmem>>, vector<1x4x1x16xf32>
    %7 = vector.shape_cast %6 : vector<1x4x1x16xf32> to vector<1x4x16xf32>
    %8 = arith.maximumf %1, %3 : vector<1x4x16xf32>
    %9 = arith.maximumf %5, %7 : vector<1x4x16xf32>
    %10 = arith.maximumf %8, %9 : vector<1x4x16xf32>
    %11 = vector.extract_strided_slice %10 {offsets = [0, 0, 0], sizes = [1, 4, 4], strides = [1, 1, 1]} : vector<1x4x16xf32> to vector<1x4x4xf32>
    %cst = arith.constant dense<0xFF800000> : vector<1x4xf32>
    %12 = vector.multi_reduction <maximumf>, %11, %cst [2] : vector<1x4x4xf32> to vector<1x4xf32>
    %13 = vector.shape_cast %12 : vector<1x4xf32> to vector<1x4x1xf32>
    %c0_12 = arith.constant 0 : index
    %c0_13 = arith.constant 0 : index
    %c0_14 = arith.constant 0 : index
    %14 = vector.load %arg5[%c0_12, %c0_13, %c0_14] : memref<1x4x16xf32, #tpu.memory_space<vmem>>, vector<1x4x1xf32>
    tpu.vector_store %arg5[%c0_12, %c0_13, %c0_14], %13 {strides = array<i32>} : memref<1x4x16xf32, #tpu.memory_space<vmem>>, vector<1x4x1xf32>,
    %15 = vector.extract_strided_slice %10 {offsets = [0, 0, 4], sizes = [1, 4, 4], strides = [1, 1, 1]} : vector<1x4x16xf32> to vector<1x4x4xf32>
    %cst_15 = arith.constant dense<0xFF800000> : vector<1x4xf32>
    %16 = vector.multi_reduction <maximumf>, %15, %cst_15 [2] : vector<1x4x4xf32> to vector<1x4xf32>
    %17 = vector.shape_cast %16 : vector<1x4xf32> to vector<1x4x1xf32>
    %c0_16 = arith.constant 0 : index
    %c0_17 = arith.constant 0 : index
    %c1_18 = arith.constant 1 : index
    %18 = vector.load %arg5[%c0_16, %c0_17, %c1_18] : memref<1x4x16xf32, #tpu.memory_space<vmem>>, vector<1x4x1xf32>
    tpu.vector_store %arg5[%c0_16, %c0_17, %c1_18], %17 {strides = array<i32>} : memref<1x4x16xf32, #tpu.memory_space<vmem>>, vector<1x4x1xf32>,
    %19 = vector.extract_strided_slice %10 {offsets = [0, 0, 8], sizes = [1, 4, 4], strides = [1, 1, 1]} : vector<1x4x16xf32> to vector<1x4x4xf32>
    %cst_19 = arith.constant dense<0xFF800000> : vector<1x4xf32>
    %20 = vector.multi_reduction <maximumf>, %19, %cst_19 [2] : vector<1x4x4xf32> to vector<1x4xf32>
    %21 = vector.shape_cast %20 : vector<1x4xf32> to vector<1x4x1xf32>
    %c0_20 = arith.constant 0 : index
    %c0_21 = arith.constant 0 : index
    %c2_22 = arith.constant 2 : index
    %22 = vector.load %arg5[%c0_20, %c0_21, %c2_22] : memref<1x4x16xf32, #tpu.memory_space<vmem>>, vector<1x4x1xf32>
    tpu.vector_store %arg5[%c0_20, %c0_21, %c2_22], %21 {strides = array<i32>} : memref<1x4x16xf32, #tpu.memory_space<vmem>>, vector<1x4x1xf32>,
    %23 = vector.extract_strided_slice %10 {offsets = [0, 0, 12], sizes = [1, 4, 4], strides = [1, 1, 1]} : vector<1x4x16xf32> to vector<1x4x4xf32>
    %cst_23 = arith.constant dense<0xFF800000> : vector<1x4xf32>
    %24 = vector.multi_reduction <maximumf>, %23, %cst_23 [2] : vector<1x4x4xf32> to vector<1x4xf32>
    %25 = vector.shape_cast %24 : vector<1x4xf32> to vector<1x4x1xf32>
    %c0_24 = arith.constant 0 : index
    %c0_25 = arith.constant 0 : index
    %c3_26 = arith.constant 3 : index
    %26 = vector.load %arg5[%c0_24, %c0_25, %c3_26] : memref<1x4x16xf32, #tpu.memory_space<vmem>>, vector<1x4x1xf32>
    tpu.vector_store %arg5[%c0_24, %c0_25, %c3_26], %25 {strides = array<i32>} : memref<1x4x16xf32, #tpu.memory_space<vmem>>, vector<1x4x1xf32>,
    %c0_27 = arith.constant 0 : index
    %c0_28 = arith.constant 0 : index
    %c4 = arith.constant 4 : index
    %c0_29 = arith.constant 0 : index
    %27 = vector.load %arg2[%c0_27, %c0_28, %c4, %c0_29] : memref<1x4x16x16xf32, #tpu.memory_space<vmem>>, vector<1x4x1x16xf32>
    %28 = vector.shape_cast %27 : vector<1x4x1x16xf32> to vector<1x4x16xf32>
    %c0_30 = arith.constant 0 : index
    %c0_31 = arith.constant 0 : index
    %c5 = arith.constant 5 : index
    %c0_32 = arith.constant 0 : index
    %29 = vector.load %arg2[%c0_30, %c0_31, %c5, %c0_32] : memref<1x4x16x16xf32, #tpu.memory_space<vmem>>, vector<1x4x1x16xf32>
    %30 = vector.shape_cast %29 : vector<1x4x1x16xf32> to vector<1x4x16xf32>
    %c0_33 = arith.constant 0 : index
    %c0_34 = arith.constant 0 : index
    %c6 = arith.constant 6 : index
    %c0_35 = arith.constant 0 : index
    %31 = vector.load %arg2[%c0_33, %c0_34, %c6, %c0_35] : memref<1x4x16x16xf32, #tpu.memory_space<vmem>>, vector<1x4x1x16xf32>
    %32 = vector.shape_cast %31 : vector<1x4x1x16xf32> to vector<1x4x16xf32>
    %c0_36 = arith.constant 0 : index
    %c0_37 = arith.constant 0 : index
    %c7 = arith.constant 7 : index
    %c0_38 = arith.constant 0 : index
    %33 = vector.load %arg2[%c0_36, %c0_37, %c7, %c0_38] : memref<1x4x16x16xf32, #tpu.memory_space<vmem>>, vector<1x4x1x16xf32>
    %34 = vector.shape_cast %33 : vector<1x4x1x16xf32> to vector<1x4x16xf32>
    %35 = arith.maximumf %28, %30 : vector<1x4x16xf32>
    %36 = arith.maximumf %32, %34 : vector<1x4x16xf32>
    %37 = arith.maximumf %35, %36 : vector<1x4x16xf32>
    %38 = vector.extract_strided_slice %37 {offsets = [0, 0, 0], sizes = [1, 4, 4], strides = [1, 1, 1]} : vector<1x4x16xf32> to vector<1x4x4xf32>
    %cst_39 = arith.constant dense<0xFF800000> : vector<1x4xf32>
    %39 = vector.multi_reduction <maximumf>, %38, %cst_39 [2] : vector<1x4x4xf32> to vector<1x4xf32>
    %40 = vector.shape_cast %39 : vector<1x4xf32> to vector<1x4x1xf32>
    %c0_40 = arith.constant 0 : index
    %c0_41 = arith.constant 0 : index
    %c4_42 = arith.constant 4 : index
    %41 = vector.load %arg5[%c0_40, %c0_41, %c4_42] : memref<1x4x16xf32, #tpu.memory_space<vmem>>, vector<1x4x1xf32>
    tpu.vector_store %arg5[%c0_40, %c0_41, %c4_42], %40 {strides = array<i32>} : memref<1x4x16xf32, #tpu.memory_space<vmem>>, vector<1x4x1xf32>,
    %42 = vector.extract_strided_slice %37 {offsets = [0, 0, 4], sizes = [1, 4, 4], strides = [1, 1, 1]} : vector<1x4x16xf32> to vector<1x4x4xf32>
    %cst_43 = arith.constant dense<0xFF800000> : vector<1x4xf32>
    %43 = vector.multi_reduction <maximumf>, %42, %cst_43 [2] : vector<1x4x4xf32> to vector<1x4xf32>
    %44 = vector.shape_cast %43 : vector<1x4xf32> to vector<1x4x1xf32>
    %c0_44 = arith.constant 0 : index
    %c0_45 = arith.constant 0 : index
    %c5_46 = arith.constant 5 : index
    %45 = vector.load %arg5[%c0_44, %c0_45, %c5_46] : memref<1x4x16xf32, #tpu.memory_space<vmem>>, vector<1x4x1xf32>
    tpu.vector_store %arg5[%c0_44, %c0_45, %c5_46], %44 {strides = array<i32>} : memref<1x4x16xf32, #tpu.memory_space<vmem>>, vector<1x4x1xf32>,
    %46 = vector.extract_strided_slice %37 {offsets = [0, 0, 8], sizes = [1, 4, 4], strides = [1, 1, 1]} : vector<1x4x16xf32> to vector<1x4x4xf32>
    %cst_47 = arith.constant dense<0xFF800000> : vector<1x4xf32>
    %47 = vector.multi_reduction <maximumf>, %46, %cst_47 [2] : vector<1x4x4xf32> to vector<1x4xf32>
    %48 = vector.shape_cast %47 : vector<1x4xf32> to vector<1x4x1xf32>
    %c0_48 = arith.constant 0 : index
    %c0_49 = arith.constant 0 : index
    %c6_50 = arith.constant 6 : index
    %49 = vector.load %arg5[%c0_48, %c0_49, %c6_50] : memref<1x4x16xf32, #tpu.memory_space<vmem>>, vector<1x4x1xf32>
    tpu.vector_store %arg5[%c0_48, %c0_49, %c6_50], %48 {strides = array<i32>} : memref<1x4x16xf32, #tpu.memory_space<vmem>>, vector<1x4x1xf32>,
    %50 = vector.extract_strided_slice %37 {offsets = [0, 0, 12], sizes = [1, 4, 4], strides = [1, 1, 1]} : vector<1x4x16xf32> to vector<1x4x4xf32>
    %cst_51 = arith.constant dense<0xFF800000> : vector<1x4xf32>
    %51 = vector.multi_reduction <maximumf>, %50, %cst_51 [2] : vector<1x4x4xf32> to vector<1x4xf32>
    %52 = vector.shape_cast %51 : vector<1x4xf32> to vector<1x4x1xf32>
    %c0_52 = arith.constant 0 : index
    %c0_53 = arith.constant 0 : index
    %c7_54 = arith.constant 7 : index
    %53 = vector.load %arg5[%c0_52, %c0_53, %c7_54] : memref<1x4x16xf32, #tpu.memory_space<vmem>>, vector<1x4x1xf32>
    tpu.vector_store %arg5[%c0_52, %c0_53, %c7_54], %52 {strides = array<i32>} : memref<1x4x16xf32, #tpu.memory_space<vmem>>, vector<1x4x1xf32>,
    %c0_55 = arith.constant 0 : index
    %c0_56 = arith.constant 0 : index
    %c8 = arith.constant 8 : index
    %c0_57 = arith.constant 0 : index
    %54 = vector.load %arg2[%c0_55, %c0_56, %c8, %c0_57] : memref<1x4x16x16xf32, #tpu.memory_space<vmem>>, vector<1x4x1x16xf32>
    %55 = vector.shape_cast %54 : vector<1x4x1x16xf32> to vector<1x4x16xf32>
    %c0_58 = arith.constant 0 : index
    %c0_59 = arith.constant 0 : index
    %c9 = arith.constant 9 : index
    %c0_60 = arith.constant 0 : index
    %56 = vector.load %arg2[%c0_58, %c0_59, %c9, %c0_60] : memref<1x4x16x16xf32, #tpu.memory_space<vmem>>, vector<1x4x1x16xf32>
    %57 = vector.shape_cast %56 : vector<1x4x1x16xf32> to vector<1x4x16xf32>
    %c0_61 = arith.constant 0 : index
    %c0_62 = arith.constant 0 : index
    %c10 = arith.constant 10 : index
    %c0_63 = arith.constant 0 : index
    %58 = vector.load %arg2[%c0_61, %c0_62, %c10, %c0_63] : memref<1x4x16x16xf32, #tpu.memory_space<vmem>>, vector<1x4x1x16xf32>
    %59 = vector.shape_cast %58 : vector<1x4x1x16xf32> to vector<1x4x16xf32>
    %c0_64 = arith.constant 0 : index
    %c0_65 = arith.constant 0 : index
    %c11 = arith.constant 11 : index
    %c0_66 = arith.constant 0 : index
    %60 = vector.load %arg2[%c0_64, %c0_65, %c11, %c0_66] : memref<1x4x16x16xf32, #tpu.memory_space<vmem>>, vector<1x4x1x16xf32>
    %61 = vector.shape_cast %60 : vector<1x4x1x16xf32> to vector<1x4x16xf32>
    %62 = arith.maximumf %55, %57 : vector<1x4x16xf32>
    %63 = arith.maximumf %59, %61 : vector<1x4x16xf32>
    %64 = arith.maximumf %62, %63 : vector<1x4x16xf32>
    %65 = vector.extract_strided_slice %64 {offsets = [0, 0, 0], sizes = [1, 4, 4], strides = [1, 1, 1]} : vector<1x4x16xf32> to vector<1x4x4xf32>
    %cst_67 = arith.constant dense<0xFF800000> : vector<1x4xf32>
    %66 = vector.multi_reduction <maximumf>, %65, %cst_67 [2] : vector<1x4x4xf32> to vector<1x4xf32>
    %67 = vector.shape_cast %66 : vector<1x4xf32> to vector<1x4x1xf32>
    %c0_68 = arith.constant 0 : index
    %c0_69 = arith.constant 0 : index
    %c8_70 = arith.constant 8 : index
    %68 = vector.load %arg5[%c0_68, %c0_69, %c8_70] : memref<1x4x16xf32, #tpu.memory_space<vmem>>, vector<1x4x1xf32>
    tpu.vector_store %arg5[%c0_68, %c0_69, %c8_70], %67 {strides = array<i32>} : memref<1x4x16xf32, #tpu.memory_space<vmem>>, vector<1x4x1xf32>,
    %69 = vector.extract_strided_slice %64 {offsets = [0, 0, 4], sizes = [1, 4, 4], strides = [1, 1, 1]} : vector<1x4x16xf32> to vector<1x4x4xf32>
    %cst_71 = arith.constant dense<0xFF800000> : vector<1x4xf32>
    %70 = vector.multi_reduction <maximumf>, %69, %cst_71 [2] : vector<1x4x4xf32> to vector<1x4xf32>
    %71 = vector.shape_cast %70 : vector<1x4xf32> to vector<1x4x1xf32>
    %c0_72 = arith.constant 0 : index
    %c0_73 = arith.constant 0 : index
    %c9_74 = arith.constant 9 : index
    %72 = vector.load %arg5[%c0_72, %c0_73, %c9_74] : memref<1x4x16xf32, #tpu.memory_space<vmem>>, vector<1x4x1xf32>
    tpu.vector_store %arg5[%c0_72, %c0_73, %c9_74], %71 {strides = array<i32>} : memref<1x4x16xf32, #tpu.memory_space<vmem>>, vector<1x4x1xf32>,
    %73 = vector.extract_strided_slice %64 {offsets = [0, 0, 8], sizes = [1, 4, 4], strides = [1, 1, 1]} : vector<1x4x16xf32> to vector<1x4x4xf32>
    %cst_75 = arith.constant dense<0xFF800000> : vector<1x4xf32>
    %74 = vector.multi_reduction <maximumf>, %73, %cst_75 [2] : vector<1x4x4xf32> to vector<1x4xf32>
    %75 = vector.shape_cast %74 : vector<1x4xf32> to vector<1x4x1xf32>
    %c0_76 = arith.constant 0 : index
    %c0_77 = arith.constant 0 : index
    %c10_78 = arith.constant 10 : index
    %76 = vector.load %arg5[%c0_76, %c0_77, %c10_78] : memref<1x4x16xf32, #tpu.memory_space<vmem>>, vector<1x4x1xf32>
    tpu.vector_store %arg5[%c0_76, %c0_77, %c10_78], %75 {strides = array<i32>} : memref<1x4x16xf32, #tpu.memory_space<vmem>>, vector<1x4x1xf32>,
    %77 = vector.extract_strided_slice %64 {offsets = [0, 0, 12], sizes = [1, 4, 4], strides = [1, 1, 1]} : vector<1x4x16xf32> to vector<1x4x4xf32>
    %cst_79 = arith.constant dense<0xFF800000> : vector<1x4xf32>
    %78 = vector.multi_reduction <maximumf>, %77, %cst_79 [2] : vector<1x4x4xf32> to vector<1x4xf32>
    %79 = vector.shape_cast %78 : vector<1x4xf32> to vector<1x4x1xf32>
    %c0_80 = arith.constant 0 : index
    %c0_81 = arith.constant 0 : index
    %c11_82 = arith.constant 11 : index
    %80 = vector.load %arg5[%c0_80, %c0_81, %c11_82] : memref<1x4x16xf32, #tpu.memory_space<vmem>>, vector<1x4x1xf32>
    tpu.vector_store %arg5[%c0_80, %c0_81, %c11_82], %79 {strides = array<i32>} : memref<1x4x16xf32, #tpu.memory_space<vmem>>, vector<1x4x1xf32>,
    %c0_83 = arith.constant 0 : index
    %c0_84 = arith.constant 0 : index
    %c12 = arith.constant 12 : index
    %c0_85 = arith.constant 0 : index
    %81 = vector.load %arg2[%c0_83, %c0_84, %c12, %c0_85] : memref<1x4x16x16xf32, #tpu.memory_space<vmem>>, vector<1x4x1x16xf32>
    %82 = vector.shape_cast %81 : vector<1x4x1x16xf32> to vector<1x4x16xf32>
    %c0_86 = arith.constant 0 : index
    %c0_87 = arith.constant 0 : index
    %c13 = arith.constant 13 : index
    %c0_88 = arith.constant 0 : index
    %83 = vector.load %arg2[%c0_86, %c0_87, %c13, %c0_88] : memref<1x4x16x16xf32, #tpu.memory_space<vmem>>, vector<1x4x1x16xf32>
    %84 = vector.shape_cast %83 : vector<1x4x1x16xf32> to vector<1x4x16xf32>
    %c0_89 = arith.constant 0 : index
    %c0_90 = arith.constant 0 : index
    %c14 = arith.constant 14 : index
    %c0_91 = arith.constant 0 : index
    %85 = vector.load %arg2[%c0_89, %c0_90, %c14, %c0_91] : memref<1x4x16x16xf32, #tpu.memory_space<vmem>>, vector<1x4x1x16xf32>
    %86 = vector.shape_cast %85 : vector<1x4x1x16xf32> to vector<1x4x16xf32>
    %c0_92 = arith.constant 0 : index
    %c0_93 = arith.constant 0 : index
    %c15 = arith.constant 15 : index
    %c0_94 = arith.constant 0 : index
    %87 = vector.load %arg2[%c0_92, %c0_93, %c15, %c0_94] : memref<1x4x16x16xf32, #tpu.memory_space<vmem>>, vector<1x4x1x16xf32>
    %88 = vector.shape_cast %87 : vector<1x4x1x16xf32> to vector<1x4x16xf32>
    %89 = arith.maximumf %82, %84 : vector<1x4x16xf32>
    %90 = arith.maximumf %86, %88 : vector<1x4x16xf32>
    %91 = arith.maximumf %89, %90 : vector<1x4x16xf32>
    %92 = vector.extract_strided_slice %91 {offsets = [0, 0, 0], sizes = [1, 4, 4], strides = [1, 1, 1]} : vector<1x4x16xf32> to vector<1x4x4xf32>
    %cst_95 = arith.constant dense<0xFF800000> : vector<1x4xf32>
    %93 = vector.multi_reduction <maximumf>, %92, %cst_95 [2] : vector<1x4x4xf32> to vector<1x4xf32>
    %94 = vector.shape_cast %93 : vector<1x4xf32> to vector<1x4x1xf32>
    %c0_96 = arith.constant 0 : index
    %c0_97 = arith.constant 0 : index
    %c12_98 = arith.constant 12 : index
    %95 = vector.load %arg5[%c0_96, %c0_97, %c12_98] : memref<1x4x16xf32, #tpu.memory_space<vmem>>, vector<1x4x1xf32>
    tpu.vector_store %arg5[%c0_96, %c0_97, %c12_98], %94 {strides = array<i32>} : memref<1x4x16xf32, #tpu.memory_space<vmem>>, vector<1x4x1xf32>,
    %96 = vector.extract_strided_slice %91 {offsets = [0, 0, 4], sizes = [1, 4, 4], strides = [1, 1, 1]} : vector<1x4x16xf32> to vector<1x4x4xf32>
    %cst_99 = arith.constant dense<0xFF800000> : vector<1x4xf32>
    %97 = vector.multi_reduction <maximumf>, %96, %cst_99 [2] : vector<1x4x4xf32> to vector<1x4xf32>
    %98 = vector.shape_cast %97 : vector<1x4xf32> to vector<1x4x1xf32>
    %c0_100 = arith.constant 0 : index
    %c0_101 = arith.constant 0 : index
    %c13_102 = arith.constant 13 : index
    %99 = vector.load %arg5[%c0_100, %c0_101, %c13_102] : memref<1x4x16xf32, #tpu.memory_space<vmem>>, vector<1x4x1xf32>
    tpu.vector_store %arg5[%c0_100, %c0_101, %c13_102], %98 {strides = array<i32>} : memref<1x4x16xf32, #tpu.memory_space<vmem>>, vector<1x4x1xf32>,
    %100 = vector.extract_strided_slice %91 {offsets = [0, 0, 8], sizes = [1, 4, 4], strides = [1, 1, 1]} : vector<1x4x16xf32> to vector<1x4x4xf32>
    %cst_103 = arith.constant dense<0xFF800000> : vector<1x4xf32>
    %101 = vector.multi_reduction <maximumf>, %100, %cst_103 [2] : vector<1x4x4xf32> to vector<1x4xf32>
    %102 = vector.shape_cast %101 : vector<1x4xf32> to vector<1x4x1xf32>
    %c0_104 = arith.constant 0 : index
    %c0_105 = arith.constant 0 : index
    %c14_106 = arith.constant 14 : index
    %103 = vector.load %arg5[%c0_104, %c0_105, %c14_106] : memref<1x4x16xf32, #tpu.memory_space<vmem>>, vector<1x4x1xf32>
    tpu.vector_store %arg5[%c0_104, %c0_105, %c14_106], %102 {strides = array<i32>} : memref<1x4x16xf32, #tpu.memory_space<vmem>>, vector<1x4x1xf32>,
    %104 = vector.extract_strided_slice %91 {offsets = [0, 0, 12], sizes = [1, 4, 4], strides = [1, 1, 1]} : vector<1x4x16xf32> to vector<1x4x4xf32>
    %cst_107 = arith.constant dense<0xFF800000> : vector<1x4xf32>
    %105 = vector.multi_reduction <maximumf>, %104, %cst_107 [2] : vector<1x4x4xf32> to vector<1x4xf32>
    %106 = vector.shape_cast %105 : vector<1x4xf32> to vector<1x4x1xf32>
    %c0_108 = arith.constant 0 : index
    %c0_109 = arith.constant 0 : index
    %c15_110 = arith.constant 15 : index
    %107 = vector.load %arg5[%c0_108, %c0_109, %c15_110] : memref<1x4x16xf32, #tpu.memory_space<vmem>>, vector<1x4x1xf32>
    tpu.vector_store %arg5[%c0_108, %c0_109, %c15_110], %106 {strides = array<i32>} : memref<1x4x16xf32, #tpu.memory_space<vmem>>, vector<1x4x1xf32>,
    %108 = arith.maximumf %13, %17 : vector<1x4x1xf32>
    %109 = arith.maximumf %21, %25 : vector<1x4x1xf32>
    %110 = arith.maximumf %40, %44 : vector<1x4x1xf32>
    %111 = arith.maximumf %48, %52 : vector<1x4x1xf32>
    %112 = arith.maximumf %67, %71 : vector<1x4x1xf32>
    %113 = arith.maximumf %75, %79 : vector<1x4x1xf32>
    %114 = arith.maximumf %94, %98 : vector<1x4x1xf32>
    %115 = arith.maximumf %102, %106 : vector<1x4x1xf32>
    %116 = arith.maximumf %108, %109 : vector<1x4x1xf32>
    %117 = arith.maximumf %110, %111 : vector<1x4x1xf32>
    %118 = arith.maximumf %112, %113 : vector<1x4x1xf32>
    %119 = arith.maximumf %114, %115 : vector<1x4x1xf32>
    %120 = arith.maximumf %116, %117 : vector<1x4x1xf32>
    %121 = arith.maximumf %118, %119 : vector<1x4x1xf32>
    %122 = arith.maximumf %120, %121 : vector<1x4x1xf32>
    %c0_111 = arith.constant 0 : index
    %c0_112 = arith.constant 0 : index
    %c0_113 = arith.constant 0 : index
    %123 = vector.load %arg3[%c0_111, %c0_112, %c0_113] : memref<1x4x1xf32, #tpu.memory_space<vmem>>, vector<1x4x1xf32>
    tpu.vector_store %arg3[%c0_111, %c0_112, %c0_113], %122 {strides = array<i32>} : memref<1x4x1xf32, #tpu.memory_space<vmem>>, vector<1x4x1xf32>,
    %124 = arith.maximumf %13, %17 : vector<1x4x1xf32>
    %125 = arith.maximumf %40, %44 : vector<1x4x1xf32>
    %126 = arith.maximumf %124, %125 : vector<1x4x1xf32>
    %c0_114 = arith.constant 0 : index
    %c0_115 = arith.constant 0 : index
    %c0_116 = arith.constant 0 : index
    %127 = vector.load %arg4[%c0_114, %c0_115, %c0_116] : memref<1x4x4xf32, #tpu.memory_space<vmem>>, vector<1x4x1xf32>
    tpu.vector_store %arg4[%c0_114, %c0_115, %c0_116], %126 {strides = array<i32>} : memref<1x4x4xf32, #tpu.memory_space<vmem>>, vector<1x4x1xf32>,
    %128 = arith.maximumf %21, %25 : vector<1x4x1xf32>
    %129 = arith.maximumf %48, %52 : vector<1x4x1xf32>
    %130 = arith.maximumf %128, %129 : vector<1x4x1xf32>
    %c0_117 = arith.constant 0 : index
    %c0_118 = arith.constant 0 : index
    %c1_119 = arith.constant 1 : index
    %131 = vector.load %arg4[%c0_117, %c0_118, %c1_119] : memref<1x4x4xf32, #tpu.memory_space<vmem>>, vector<1x4x1xf32>
    tpu.vector_store %arg4[%c0_117, %c0_118, %c1_119], %130 {strides = array<i32>} : memref<1x4x4xf32, #tpu.memory_space<vmem>>, vector<1x4x1xf32>,
    %132 = arith.maximumf %67, %71 : vector<1x4x1xf32>
    %133 = arith.maximumf %94, %98 : vector<1x4x1xf32>
    %134 = arith.maximumf %132, %133 : vector<1x4x1xf32>
    %c0_120 = arith.constant 0 : index
    %c0_121 = arith.constant 0 : index
    %c2_122 = arith.constant 2 : index
    %135 = vector.load %arg4[%c0_120, %c0_121, %c2_122] : memref<1x4x4xf32, #tpu.memory_space<vmem>>, vector<1x4x1xf32>
    tpu.vector_store %arg4[%c0_120, %c0_121, %c2_122], %134 {strides = array<i32>} : memref<1x4x4xf32, #tpu.memory_space<vmem>>, vector<1x4x1xf32>,
    %136 = arith.maximumf %75, %79 : vector<1x4x1xf32>
    %137 = arith.maximumf %102, %106 : vector<1x4x1xf32>
    %138 = arith.maximumf %136, %137 : vector<1x4x1xf32>
    %c0_123 = arith.constant 0 : index
    %c0_124 = arith.constant 0 : index
    %c3_125 = arith.constant 3 : index
    %139 = vector.load %arg4[%c0_123, %c0_124, %c3_125] : memref<1x4x4xf32, #tpu.memory_space<vmem>>, vector<1x4x1xf32>
    tpu.vector_store %arg4[%c0_123, %c0_124, %c3_125], %138 {strides = array<i32>} : memref<1x4x4xf32, #tpu.memory_space<vmem>>, vector<1x4x1xf32>,
    return
  }
  func.func @transform_0(%arg0: i32, %arg1: i32) -> (i32, i32, i32, i32) {
    %c0_i32 = arith.constant 0 : i32
    %c0_i32_0 = arith.constant 0 : i32
    %c0_i32_1 = arith.constant 0 : i32
    return %arg0, %arg1, %c0_i32, %c0_i32_0 : i32, i32, i32, i32
  }
  func.func @transform_1(%arg0: i32, %arg1: i32) -> (i32, i32, i32) {
    %c0_i32 = arith.constant 0 : i32
    %c0_i32_0 = arith.constant 0 : i32
    return %arg0, %arg1, %c0_i32 : i32, i32, i32
  }
  func.func @transform_2(%arg0: i32, %arg1: i32) -> (i32, i32, i32) {
    %c0_i32 = arith.constant 0 : i32
    %c0_i32_0 = arith.constant 0 : i32
    return %arg0, %arg1, %c0_i32 : i32, i32, i32
  }
  func.func @transform_3(%arg0: i32, %arg1: i32) -> (i32, i32, i32) {
    %c0_i32 = arith.constant 0 : i32
    %c0_i32_0 = arith.constant 0 : i32
    return %arg0, %arg1, %c0_i32 : i32, i32, i32
  }
}

</mosaic_0001>

<llo_original>
// kernel: _lambda_.1
$region0: #{_lambda_.1}
  #allocation0 [shape = 'u32[]', space=smem, size = 0x4, offset = 0x4, fixed_abs, tag = 'smem constant byte address 0x4 - core index']
  #allocation1 [shape = 'u32[72,128]{1,0:T(1,128)}', space=vmem, size = 0x9000, scoped, tag = 'internal scratch']
  %s0 = inlined_call_operand.hbm [shape: f32[2,4,16,16], index: 0, kind: input, shape index: {}]
  %s1 = inlined_call_operand.vmem [shape: f32[2,4,1], index: 1, kind: output, shape index: {0}]
  %s2 = inlined_call_operand.vmem [shape: f32[2,4,4], index: 2, kind: output, shape index: {1}]
  %s3 = inlined_call_operand.vmem [shape: f32[2,4,16], index: 3, kind: output, shape index: {2}]
  %4 = xla_tuple %s1, %s2, %s3
  %s5 = sld [smem:[#allocation0]]
  $region57: #{_lambda_.1} parent=0
    _
  %s7 = ssub.s32 1, %s5
  %s8 = scalar_select 0, %s7, %s5
  $region1: #{_lambda_.1} parent=0
    #allocation2 [shape = 'u8[65536]{0}', space=vmem, size = 0x10000, scoped, tag = 'input window, operand 0']
    #allocation3 [shape = 's32[2]{0}', space=sflag, size = 0x8, scoped, tag = 'scoped memory for _lambda_.1']
    %9 = vsyncpa [#allocation3], 0
    %s10 = scalar_lea.sflag [#allocation3], 1
    %11 = vsyncpa %s10, 0
    loop: start=0, step=1, limit=4
    $region2: #{_lambda_.1} parent=1 // loop_pre_header
      _
    $region3: #{_lambda_.1} parent=1 // loop_header
      %s13 = sphi 0, %s17
      %p14 = scmp.ge.s32.totalorder %s13, 4
      %s20 = sphi 0, %s32
      %s21 = sphi 0, %s28
      %s22 = sphi 0, %s20
      %s23 = sphi 0, %s21
      %s24 = sphi 0, %s22
      %s25 = sphi 0, %s23
      %s37 = sphi 0, %s39
      %s40 = sphi 0, %s37
      %s41 = sphi 0, %s40
      %s57 = sphi 0, %s41
      %s65 = sphi 0, %s67
      %s68 = sphi 0, %s65
      %s69 = sphi 0, %s68
      %s85 = sphi 0, %s69
      %s93 = sphi 0, %s95
      %s96 = sphi 0, %s93
      %s97 = sphi 0, %s96
      %s113 = sphi 0, %s97
      %s121 = sphi 0, %s123
      %s124 = sphi 0, %s121
      %s125 = sphi 0, %s124
      %s141 = sphi 0, %s125
    $region4: #{_lambda_.1} parent=1 // loop_header_branch
      %16 = sbr.rel (%p14) target = $region8
    $region5: #{_lambda_.1} parent=1 // loop_body
      %s18 = ssub.s32 %s13, 1
      %s19 = ssub.s32 %s13, 2
      %s26 = sadd.s32 1, %s21
      %p27 = scmp.ge.s32.totalorder %s26, 1
      %s28 = scalar_select %p27, 0, %s26
      %s29 = sadd.s32 1, %s20
      %s30 = scalar_select %p27, %s29, %s20
      %p31 = scmp.ge.s32.totalorder %s30, 2
      %s32 = scalar_select %p31, 0, %s30
      %s33 = ssub.s32 %s20, %s32
      %s34 = ssub.s32 %s21, %s28
      %s35 = sor.u32 %s33, %s34
      %p36 = scmp.eq.s32.totalorder %s35, 0
      %s38 = sadd.s32 %s37, 1
      %s39 = scalar_select %p36, %s37, %s38
      %p42 = pneg %p36
      %p43 = scmp.eq.s32.totalorder %s13, 1
      %p44 = por %p42, %p43
      %p45 = scmp.ne.s32.totalorder %s37, %s40
      %p46 = scmp.eq.s32.totalorder %s13, 0
      %p47 = por %p45, %p46
      %p48 = scmp.ne.s32.totalorder %s37, %s40
      %p49 = scmp.eq.s32.totalorder %s18, 1
      %p50 = por %p48, %p49
      %p51 = scmp.ne.s32.totalorder %s40, %s41
      %p52 = scmp.eq.s32.totalorder %s18, 0
      %p53 = por %p51, %p52
      %p54 = scmp.ne.s32.totalorder %s40, %s41
      %p55 = scmp.eq.s32.totalorder %s19, 1
      %p56 = por %p54, %p55
      %p58 = scmp.ne.s32.totalorder %s41, %s57
      %p59 = scmp.eq.s32.totalorder %s19, 0
      %p60 = por %p58, %p59
      %s61 = ssub.s32 %s20, %s32
      %s62 = ssub.s32 %s21, %s28
      %s63 = sor.u32 %s61, %s62
      %p64 = scmp.eq.s32.totalorder %s63, 0
      %s66 = sadd.s32 %s65, 1
      %s67 = scalar_select %p64, %s65, %s66
      %p70 = pneg %p64
      %p71 = scmp.eq.s32.totalorder %s13, 1
      %p72 = por %p70, %p71
      %p73 = scmp.ne.s32.totalorder %s65, %s68
      %p74 = scmp.eq.s32.totalorder %s13, 0
      %p75 = por %p73, %p74
      %p76 = scmp.ne.s32.totalorder %s65, %s68
      %p77 = scmp.eq.s32.totalorder %s18, 1
      %p78 = por %p76, %p77
      %p79 = scmp.ne.s32.totalorder %s68, %s69
      %p80 = scmp.eq.s32.totalorder %s18, 0
      %p81 = por %p79, %p80
      %p82 = scmp.ne.s32.totalorder %s68, %s69
      %p83 = scmp.eq.s32.totalorder %s19, 1
      %p84 = por %p82, %p83
      %p86 = scmp.ne.s32.totalorder %s69, %s85
      %p87 = scmp.eq.s32.totalorder %s19, 0
      %p88 = por %p86, %p87
      %s89 = ssub.s32 %s20, %s32
      %s90 = ssub.s32 %s21, %s28
      %s91 = sor.u32 %s89, %s90
      %p92 = scmp.eq.s32.totalorder %s91, 0
      %s94 = sadd.s32 %s93, 1
      %s95 = scalar_select %p92, %s93, %s94
      %p98 = pneg %p92
      %p99 = scmp.eq.s32.totalorder %s13, 1
      %p100 = por %p98, %p99
      %p101 = scmp.ne.s32.totalorder %s93, %s96
      %p102 = scmp.eq.s32.totalorder %s13, 0
      %p103 = por %p101, %p102
      %p104 = scmp.ne.s32.totalorder %s93, %s96
      %p105 = scmp.eq.s32.totalorder %s18, 1
      %p106 = por %p104, %p105
      %p107 = scmp.ne.s32.totalorder %s96, %s97
      %p108 = scmp.eq.s32.totalorder %s18, 0
      %p109 = por %p107, %p108
      %p110 = scmp.ne.s32.totalorder %s96, %s97
      %p111 = scmp.eq.s32.totalorder %s19, 1
      %p112 = por %p110, %p111
      %p114 = scmp.ne.s32.totalorder %s97, %s113
      %p115 = scmp.eq.s32.totalorder %s19, 0
      %p116 = por %p114, %p115
      %s117 = ssub.s32 %s20, %s32
      %s118 = ssub.s32 %s21, %s28
      %s119 = sor.u32 %s117, %s118
      %p120 = scmp.eq.s32.totalorder %s119, 0
      %s122 = sadd.s32 %s121, 1
      %s123 = scalar_select %p120, %s121, %s122
      %p126 = pneg %p120
      %p127 = scmp.eq.s32.totalorder %s13, 1
      %p128 = por %p126, %p127
      %p129 = scmp.ne.s32.totalorder %s121, %s124
      %p130 = scmp.eq.s32.totalorder %s13, 0
      %p131 = por %p129, %p130
      %p132 = scmp.ne.s32.totalorder %s121, %s124
      %p133 = scmp.eq.s32.totalorder %s18, 1
      %p134 = por %p132, %p133
      %p135 = scmp.ne.s32.totalorder %s124, %s125
      %p136 = scmp.eq.s32.totalorder %s18, 0
      %p137 = por %p135, %p136
      %p138 = scmp.ne.s32.totalorder %s124, %s125
      %p139 = scmp.eq.s32.totalorder %s19, 1
      %p140 = por %p138, %p139
      %p142 = scmp.ne.s32.totalorder %s125, %s141
      %p143 = scmp.eq.s32.totalorder %s19, 0
      %p144 = por %p142, %p143
      %p145 = scmp.le.s32.totalorder 1, %s13
      %p146 = scmp.lt.s32.totalorder %s13, 3
      %p147 = pnand %p145, %p146
      %p148 = pneg %p147
      // Predicated region
      $region9: #{_lambda_.1} parent=5 // pred_check
        _
      $region10: #{_lambda_.1} parent=5 // pred_check_branch
        %150 = sbr.rel (%p147) target = $region12
      $region11: #{_lambda_.1} parent=5 // pred_region
        %s151 = ssub.s32 %s13, 1
      $region12: #{_lambda_.1} parent=5 // pred_fallthru
        _
      %p152 = scmp.lt.s32.totalorder %s13, 2
      // Predicated region
      $region13: #{_lambda_.1} parent=5 // pred_check
        %p153 = pneg %p152
      $region14: #{_lambda_.1} parent=5 // pred_check_branch
        %155 = sbr.rel (%p153) target = $region16
      $region15: #{_lambda_.1} parent=5 // pred_region
        // Predicated region
        $region17: #{_lambda_.1} parent=15 // pred_check
          %p156 = pneg %p47
        $region18: #{_lambda_.1} parent=15 // pred_check_branch
          %158 = sbr.rel (%p156) target = $region20
        $region19: #{_lambda_.1} parent=15 // pred_region
          %s159 = sand.u32 %s37, 1
          %s160 = scalar_lea.sflag [#allocation3], %s159
          %s161 = sand.u32 %s37, 1
          %s162 = smul.addr %s161, 64
          %s163 = scalar_lea.vmem [#allocation2], %s162
          %s164 = smul.u32 4, %s21
          %166 = vsyncadd %s160, 0
          %s167 = smul.addr %s164, 2
          %s168 = smul.addr %s20, 8
          %s169 = sadd.s32 %s167, %s168
          %s170 = smul.addr %s169, 8
          %s171 = scalar_lea.hbm %s0, %s170
          %s172 = sshll.u32 %s171, 4
          %s173 = int_to_ptr.hbm [resolvable:$true] %s172
          %s174 = sshll.u32 %s163, 4
          %s175 = int_to_ptr.vmem [resolvable:$true] %s174
          %180 = dma.hbm_to_vmem [thread:$0]  %s173, 1024, %s175, %s160, 128, 128, 8
        $region20: #{_lambda_.1} parent=15 // pred_fallthru
          _
      $region16: #{_lambda_.1} parent=5 // pred_fallthru
        _
      %p181 = scmp.le.s32.totalorder 1, %s13
      %p182 = scmp.lt.s32.totalorder %s13, 3
      %p183 = pnand %p181, %p182
      %p184 = pneg %p183
      // Predicated region
      $region21: #{_lambda_.1} parent=5 // pred_check
        _
      $region22: #{_lambda_.1} parent=5 // pred_check_branch
        %186 = sbr.rel (%p183) target = $region24
      $region23: #{_lambda_.1} parent=5 // pred_region
        %s187 = ssub.s32 %s13, 1
        %s188 = sand.u32 %s40, 1
        %s189 = scalar_lea.sflag [#allocation3], %s188
        %s190 = sand.u32 %s40, 1
        %s191 = smul.addr %s190, 64
        %s192 = scalar_lea.vmem [#allocation2], %s191
        // Predicated region
        $region25: #{_lambda_.1} parent=23 // pred_check
          %p193 = pneg %p53
        $region26: #{_lambda_.1} parent=23 // pred_check_branch
          %195 = sbr.rel (%p193) target = $region28
        $region27: #{_lambda_.1} parent=23 // pred_region
          %197 = dma.done %s189, 1024
        $region28: #{_lambda_.1} parent=23 // pred_fallthru
          _
        %s198 = sand.u32 %s40, 1
        %s199 = scalar_lea.sflag [#allocation3], %s198
        %s200 = sand.u32 %s40, 1
        %s201 = smul.addr %s200, 64
        %s202 = scalar_lea.vmem [#allocation2], %s201
        %p203 = pneg %p53
        %p204 = pneg %p50
        %p205 = pneg %p81
        %p206 = pneg %p78
        %p207 = scmp.lt.s32.totalorder %s22, 1
        %s208 = scalar_select %p207, %s22, 1
        %p209 = scmp.lt.s32.totalorder %s23, 0
        %s210 = scalar_select %p209, %s23, 0
        %s211 = sadd.s32 %s210, %s208
        %s212 = smul.addr %s211, 4
        %s213 = scalar_lea.vmem %s1, %s212
        %p214 = pneg %p109
        %p215 = pneg %p106
        %p216 = scmp.lt.s32.totalorder %s22, 1
        %s217 = scalar_select %p216, %s22, 1
        %p218 = scmp.lt.s32.totalorder %s23, 0
        %s219 = scalar_select %p218, %s23, 0
        %s220 = sadd.s32 %s219, %s217
        %s221 = smul.addr %s220, 4
        %s222 = scalar_lea.vmem %s2, %s221
        %p223 = pneg %p137
        %p224 = pneg %p134
        %p225 = scmp.lt.s32.totalorder %s22, 1
        %s226 = scalar_select %p225, %s22, 1
        %p227 = scmp.lt.s32.totalorder %s23, 0
        %s228 = scalar_select %p227, %s23, 0
        %s229 = sadd.s32 %s228, %s226
        %s230 = smul.addr %s229, 4
        %s231 = scalar_lea.vmem %s3, %s230
        %s232 = smul.u32 4, %s23
        %p233 = scmp.lt.s32.totalorder %s22, 1
        %s234 = scalar_select %p233, %s22, 1
        %p235 = scmp.lt.s32.totalorder %s23, 0
        %s236 = scalar_select %p235, %s23, 0
        %s237 = sadd.s32 %s236, %s234
        %s238 = smul.addr %s237, 4
        %s239 = scalar_lea.vmem %s1, %s238
        %p240 = scmp.lt.s32.totalorder %s22, 1
        %s241 = scalar_select %p240, %s22, 1
        %p242 = scmp.lt.s32.totalorder %s23, 0
        %s243 = scalar_select %p242, %s23, 0
        %s244 = sadd.s32 %s243, %s241
        %s245 = smul.addr %s244, 4
        %s246 = scalar_lea.vmem %s2, %s245
        %p247 = scmp.lt.s32.totalorder %s22, 1
        %s248 = scalar_select %p247, %s22, 1
        %p249 = scmp.lt.s32.totalorder %s23, 0
        %s250 = scalar_select %p249, %s23, 0
        %s251 = sadd.s32 %s250, %s248
        %s252 = smul.addr %s251, 4
        %s253 = scalar_lea.vmem %s3, %s252
        %v254 = vld [vmem:[%s192] sm:$0x1]
        %v255 = vld [vmem:[%s192 + $0x10] sm:$0x1]
        %v256 = vld [vmem:[%s192 + $0x20] sm:$0x1]
        %v257 = vld [vmem:[%s192 + $0x30] sm:$0x1]
        %v258 = vld [vmem:[%s192 + $0x1] sm:$0x1]
        %v259 = vld [vmem:[%s192 + $0x11] sm:$0x1]
        %v260 = vld [vmem:[%s192 + $0x21] sm:$0x1]
        %v261 = vld [vmem:[%s192 + $0x31] sm:$0x1]
        %v262 = vld [vmem:[%s192 + $0x2] sm:$0x1]
        %v263 = vld [vmem:[%s192 + $0x12] sm:$0x1]
        %v264 = vld [vmem:[%s192 + $0x22] sm:$0x1]
        %v265 = vld [vmem:[%s192 + $0x32] sm:$0x1]
        %v266 = vld [vmem:[%s192 + $0x3] sm:$0x1]
        %v267 = vld [vmem:[%s192 + $0x13] sm:$0x1]
        %v268 = vld [vmem:[%s192 + $0x23] sm:$0x1]
        %v269 = vld [vmem:[%s192 + $0x33] sm:$0x1]
        %v270 = vmax.f32 %v254, %v258
        %v271 = vmax.f32 %v255, %v259
        %v272 = vmax.f32 %v256, %v260
        %v273 = vmax.f32 %v257, %v261
        %v274 = vmax.f32 %v262, %v266
        %v275 = vmax.f32 %v263, %v267
        %v276 = vmax.f32 %v264, %v268
        %v277 = vmax.f32 %v265, %v269
        %v278 = vmax.f32 %v270, %v274
        %v279 = vmax.f32 %v271, %v275
        %v280 = vmax.f32 %v272, %v276
        %v281 = vmax.f32 %v273, %v277
        %v286 = vrot.slane %v279, 7
        %vm287 = vcmask 1041409
        %v288 = vsel %vm287, %v286, %v278
        %v289 = vrot.slane %v280, 6
        %vm290 = vcmask 1042434
        %v291 = vsel %vm290, %v289, %v288
        %v292 = vrot.slane %v281, 5
        %vm293 = vcmask 1043459
        %v294 = vsel %vm293, %v292, %v291
        %vm296 = vcmask 27648
        %v297 = vsel %vm296, %v294, -inf
        %298 = vmax.xlane.f32.xlu0 %v297
        %v299 = vpop.xlane.xlu0 %298
        %vm300 = vcmask 3072
        %301 = vst.msk [vmem:[%s253] sm:$0xf] %vm300, %v299
        %vm302 = vcmask 60448
        %v303 = vsel %vm302, %v294, -inf
        %304 = vmax.xlane.f32.xlu0 %v303
        %v305 = vpop.xlane.xlu0 %304
        %vm306 = vcmask 11272
        %307 = vst.msk [vmem:[%s253] sm:$0xf] %vm306, %v305
        %vm308 = vcmask 93248
        %v309 = vsel %vm308, %v294, -inf
        %310 = vmax.xlane.f32.xlu0 %v309
        %v311 = vpop.xlane.xlu0 %310
        %vm312 = vcmask 19472
        %313 = vst.msk [vmem:[%s253] sm:$0xf] %vm312, %v311
        %vm314 = vcmask 126048
        %v315 = vsel %vm314, %v294, -inf
        %316 = vmax.xlane.f32.xlu0 %v315
        %v317 = vpop.xlane.xlu0 %316
        %vm318 = vcmask 27672
        %319 = vst.msk [vmem:[%s253] sm:$0xf] %vm318, %v317
        %v320 = vld [vmem:[%s192 + $0x4] sm:$0x1]
        %v321 = vld [vmem:[%s192 + $0x14] sm:$0x1]
        %v322 = vld [vmem:[%s192 + $0x24] sm:$0x1]
        %v323 = vld [vmem:[%s192 + $0x34] sm:$0x1]
        %v324 = vld [vmem:[%s192 + $0x5] sm:$0x1]
        %v325 = vld [vmem:[%s192 + $0x15] sm:$0x1]
        %v326 = vld [vmem:[%s192 + $0x25] sm:$0x1]
        %v327 = vld [vmem:[%s192 + $0x35] sm:$0x1]
        %v328 = vld [vmem:[%s192 + $0x6] sm:$0x1]
        %v329 = vld [vmem:[%s192 + $0x16] sm:$0x1]
        %v330 = vld [vmem:[%s192 + $0x26] sm:$0x1]
        %v331 = vld [vmem:[%s192 + $0x36] sm:$0x1]
        %v332 = vld [vmem:[%s192 + $0x7] sm:$0x1]
        %v333 = vld [vmem:[%s192 + $0x17] sm:$0x1]
        %v334 = vld [vmem:[%s192 + $0x27] sm:$0x1]
        %v335 = vld [vmem:[%s192 + $0x37] sm:$0x1]
        %v336 = vmax.f32 %v320, %v324
        %v337 = vmax.f32 %v321, %v325
        %v338 = vmax.f32 %v322, %v326
        %v339 = vmax.f32 %v323, %v327
        %v340 = vmax.f32 %v328, %v332
        %v341 = vmax.f32 %v329, %v333
        %v342 = vmax.f32 %v330, %v334
        %v343 = vmax.f32 %v331, %v335
        %v344 = vmax.f32 %v336, %v340
        %v345 = vmax.f32 %v337, %v341
        %v346 = vmax.f32 %v338, %v342
        %v347 = vmax.f32 %v339, %v343
        %v352 = vrot.slane %v345, 7
        %v353 = vsel %vm287, %v352, %v344
        %v354 = vrot.slane %v346, 6
        %v355 = vsel %vm290, %v354, %v353
        %v356 = vrot.slane %v347, 5
        %v357 = vsel %vm293, %v356, %v355
        %v359 = vsel %vm296, %v357, -inf
        %360 = vmax.xlane.f32.xlu0 %v359
        %v361 = vpop.xlane.xlu0 %360
        %vm362 = vcmask 35872
        %363 = vst.msk [vmem:[%s253] sm:$0xf] %vm362, %v361
        %v364 = vsel %vm302, %v357, -inf
        %365 = vmax.xlane.f32.xlu0 %v364
        %v366 = vpop.xlane.xlu0 %365
        %vm367 = vcmask 44072
        %368 = vst.msk [vmem:[%s253] sm:$0xf] %vm367, %v366
        %v369 = vsel %vm308, %v357, -inf
        %370 = vmax.xlane.f32.xlu0 %v369
        %v371 = vpop.xlane.xlu0 %370
        %vm372 = vcmask 52272
        %373 = vst.msk [vmem:[%s253] sm:$0xf] %vm372, %v371
        %v374 = vsel %vm314, %v357, -inf
        %375 = vmax.xlane.f32.xlu0 %v374
        %v376 = vpop.xlane.xlu0 %375
        %vm377 = vcmask 60472
        %378 = vst.msk [vmem:[%s253] sm:$0xf] %vm377, %v376
        %v379 = vld [vmem:[%s192 + $0x8] sm:$0x1]
        %v380 = vld [vmem:[%s192 + $0x18] sm:$0x1]
        %v381 = vld [vmem:[%s192 + $0x28] sm:$0x1]
        %v382 = vld [vmem:[%s192 + $0x38] sm:$0x1]
        %v383 = vld [vmem:[%s192 + $0x9] sm:$0x1]
        %v384 = vld [vmem:[%s192 + $0x19] sm:$0x1]
        %v385 = vld [vmem:[%s192 + $0x29] sm:$0x1]
        %v386 = vld [vmem:[%s192 + $0x39] sm:$0x1]
        %v387 = vld [vmem:[%s192 + $0xa] sm:$0x1]
        %v388 = vld [vmem:[%s192 + $0x1a] sm:$0x1]
        %v389 = vld [vmem:[%s192 + $0x2a] sm:$0x1]
        %v390 = vld [vmem:[%s192 + $0x3a] sm:$0x1]
        %v391 = vld [vmem:[%s192 + $0xb] sm:$0x1]
        %v392 = vld [vmem:[%s192 + $0x1b] sm:$0x1]
        %v393 = vld [vmem:[%s192 + $0x2b] sm:$0x1]
        %v394 = vld [vmem:[%s192 + $0x3b] sm:$0x1]
        %v395 = vmax.f32 %v379, %v383
        %v396 = vmax.f32 %v380, %v384
        %v397 = vmax.f32 %v381, %v385
        %v398 = vmax.f32 %v382, %v386
        %v399 = vmax.f32 %v387, %v391
        %v400 = vmax.f32 %v388, %v392
        %v401 = vmax.f32 %v389, %v393
        %v402 = vmax.f32 %v390, %v394
        %v403 = vmax.f32 %v395, %v399
        %v404 = vmax.f32 %v396, %v400
        %v405 = vmax.f32 %v397, %v401
        %v406 = vmax.f32 %v398, %v402
        %v411 = vrot.slane %v404, 7
        %v412 = vsel %vm287, %v411, %v403
        %v413 = vrot.slane %v405, 6
        %v414 = vsel %vm290, %v413, %v412
        %v415 = vrot.slane %v406, 5
        %v416 = vsel %vm293, %v415, %v414
        %v418 = vsel %vm296, %v416, -inf
        %419 = vmax.xlane.f32.xlu0 %v418
        %v420 = vpop.xlane.xlu0 %419
        %vm421 = vcmask 68672
        %422 = vst.msk [vmem:[%s253] sm:$0xf] %vm421, %v420
        %v423 = vsel %vm302, %v416, -inf
        %424 = vmax.xlane.f32.xlu0 %v423
        %v425 = vpop.xlane.xlu0 %424
        %vm426 = vcmask 76872
        %427 = vst.msk [vmem:[%s253] sm:$0xf] %vm426, %v425
        %v428 = vsel %vm308, %v416, -inf
        %429 = vmax.xlane.f32.xlu0 %v428
        %v430 = vpop.xlane.xlu0 %429
        %vm431 = vcmask 85072
        %432 = vst.msk [vmem:[%s253] sm:$0xf] %vm431, %v430
        %v433 = vsel %vm314, %v416, -inf
        %434 = vmax.xlane.f32.xlu0 %v433
        %v435 = vpop.xlane.xlu0 %434
        %vm436 = vcmask 93272
        %437 = vst.msk [vmem:[%s253] sm:$0xf] %vm436, %v435
        %v438 = vld [vmem:[%s192 + $0xc] sm:$0x1]
        %v439 = vld [vmem:[%s192 + $0x1c] sm:$0x1]
        %v440 = vld [vmem:[%s192 + $0x2c] sm:$0x1]
        %v441 = vld [vmem:[%s192 + $0x3c] sm:$0x1]
        %v442 = vld [vmem:[%s192 + $0xd] sm:$0x1]
        %v443 = vld [vmem:[%s192 + $0x1d] sm:$0x1]
        %v444 = vld [vmem:[%s192 + $0x2d] sm:$0x1]
        %v445 = vld [vmem:[%s192 + $0x3d] sm:$0x1]
        %v446 = vld [vmem:[%s192 + $0xe] sm:$0x1]
        %v447 = vld [vmem:[%s192 + $0x1e] sm:$0x1]
        %v448 = vld [vmem:[%s192 + $0x2e] sm:$0x1]
        %v449 = vld [vmem:[%s192 + $0x3e] sm:$0x1]
        %v450 = vld [vmem:[%s192 + $0xf] sm:$0x1]
        %v451 = vld [vmem:[%s192 + $0x1f] sm:$0x1]
        %v452 = vld [vmem:[%s192 + $0x2f] sm:$0x1]
        %v453 = vld [vmem:[%s192 + $0x3f] sm:$0x1]
        %v454 = vmax.f32 %v438, %v442
        %v455 = vmax.f32 %v439, %v443
        %v456 = vmax.f32 %v440, %v444
        %v457 = vmax.f32 %v441, %v445
        %v458 = vmax.f32 %v446, %v450
        %v459 = vmax.f32 %v447, %v451
        %v460 = vmax.f32 %v448, %v452
        %v461 = vmax.f32 %v449, %v453
        %v462 = vmax.f32 %v454, %v458
        %v463 = vmax.f32 %v455, %v459
        %v464 = vmax.f32 %v456, %v460
        %v465 = vmax.f32 %v457, %v461
        %v470 = vrot.slane %v463, 7
        %v471 = vsel %vm287, %v470, %v462
        %v472 = vrot.slane %v464, 6
        %v473 = vsel %vm290, %v472, %v471
        %v474 = vrot.slane %v465, 5
        %v475 = vsel %vm293, %v474, %v473
        %v477 = vsel %vm296, %v475, -inf
        %478 = vmax.xlane.f32.xlu0 %v477
        %v479 = vpop.xlane.xlu0 %478
        %vm480 = vcmask 101472
        %481 = vst.msk [vmem:[%s253] sm:$0xf] %vm480, %v479
        %v482 = vsel %vm302, %v475, -inf
        %483 = vmax.xlane.f32.xlu0 %v482
        %v484 = vpop.xlane.xlu0 %483
        %vm485 = vcmask 109672
        %486 = vst.msk [vmem:[%s253] sm:$0xf] %vm485, %v484
        %v487 = vsel %vm308, %v475, -inf
        %488 = vmax.xlane.f32.xlu0 %v487
        %v489 = vpop.xlane.xlu0 %488
        %vm490 = vcmask 117872
        %491 = vst.msk [vmem:[%s253] sm:$0xf] %vm490, %v489
        %v492 = vsel %vm314, %v475, -inf
        %493 = vmax.xlane.f32.xlu0 %v492
        %v494 = vpop.xlane.xlu0 %493
        %vm495 = vcmask 126072
        %496 = vst.msk [vmem:[%s253] sm:$0xf] %vm495, %v494
        %v497 = vmax.f32 %v299, %v305
        %v498 = vmax.f32 %v311, %v317
        %v499 = vmax.f32 %v361, %v366
        %v500 = vmax.f32 %v371, %v376
        %v501 = vmax.f32 %v420, %v425
        %v502 = vmax.f32 %v430, %v435
        %v503 = vmax.f32 %v479, %v484
        %v504 = vmax.f32 %v489, %v494
        %v505 = vmax.f32 %v497, %v498
        %v506 = vmax.f32 %v499, %v500
        %v507 = vmax.f32 %v501, %v502
        %v508 = vmax.f32 %v503, %v504
        %v509 = vmax.f32 %v505, %v506
        %v510 = vmax.f32 %v507, %v508
        %v511 = vmax.f32 %v509, %v510
        %512 = vst.msk [vmem:[%s239] sm:$0xf] %vm300, %v511
        %v513 = vmax.f32 %v497, %v499
        %514 = vst.msk [vmem:[%s246] sm:$0xf] %vm300, %v513
        %v515 = vmax.f32 %v498, %v500
        %516 = vst.msk [vmem:[%s246] sm:$0xf] %vm306, %v515
        %v517 = vmax.f32 %v501, %v503
        %518 = vst.msk [vmem:[%s246] sm:$0xf] %vm312, %v517
        %v519 = vmax.f32 %v502, %v504
        %520 = vst.msk [vmem:[%s246] sm:$0xf] %vm318, %v519
        %p521 = scmp.lt.s32.totalorder %s22, 1
        %s522 = scalar_select %p521, %s22, 1
        %p523 = scmp.lt.s32.totalorder %s23, 0
        %s524 = scalar_select %p523, %s23, 0
        %s525 = sadd.s32 %s524, %s522
        %s526 = smul.addr %s525, 4
        %s527 = scalar_lea.vmem %s1, %s526
        %p528 = scmp.lt.s32.totalorder %s22, 1
        %s529 = scalar_select %p528, %s22, 1
        %p530 = scmp.lt.s32.totalorder %s23, 0
        %s531 = scalar_select %p530, %s23, 0
        %s532 = sadd.s32 %s531, %s529
        %s533 = smul.addr %s532, 4
        %s534 = scalar_lea.vmem %s2, %s533
        %p535 = scmp.lt.s32.totalorder %s22, 1
        %s536 = scalar_select %p535, %s22, 1
        %p537 = scmp.lt.s32.totalorder %s23, 0
        %s538 = scalar_select %p537, %s23, 0
        %s539 = sadd.s32 %s538, %s536
        %s540 = smul.addr %s539, 4
        %s541 = scalar_lea.vmem %s3, %s540
        // Predicated region
        $region29: #{_lambda_.1} parent=23 // pred_check
          %p542 = pneg %p78
        $region30: #{_lambda_.1} parent=23 // pred_check_branch
          %544 = sbr.rel (%p542) target = $region32
        $region31: #{_lambda_.1} parent=23 // pred_region
          _
        $region32: #{_lambda_.1} parent=23 // pred_fallthru
          _
        // Predicated region
        $region33: #{_lambda_.1} parent=23 // pred_check
          %p545 = pneg %p106
        $region34: #{_lambda_.1} parent=23 // pred_check_branch
          %547 = sbr.rel (%p545) target = $region36
        $region35: #{_lambda_.1} parent=23 // pred_region
          _
        $region36: #{_lambda_.1} parent=23 // pred_fallthru
          _
        // Predicated region
        $region37: #{_lambda_.1} parent=23 // pred_check
          %p548 = pneg %p134
        $region38: #{_lambda_.1} parent=23 // pred_check_branch
          %550 = sbr.rel (%p548) target = $region40
        $region39: #{_lambda_.1} parent=23 // pred_region
          _
        $region40: #{_lambda_.1} parent=23 // pred_fallthru
          _
      $region24: #{_lambda_.1} parent=5 // pred_fallthru
        _
      %p551 = scmp.le.s32.totalorder 2, %s13
      // Predicated region
      $region41: #{_lambda_.1} parent=5 // pred_check
        %p552 = pneg %p551
      $region42: #{_lambda_.1} parent=5 // pred_check_branch
        %554 = sbr.rel (%p552) target = $region44
      $region43: #{_lambda_.1} parent=5 // pred_region
        %s555 = ssub.s32 %s13, 2
        // Predicated region
        $region45: #{_lambda_.1} parent=43 // pred_check
          %p556 = pneg %p84
        $region46: #{_lambda_.1} parent=43 // pred_check_branch
          %558 = sbr.rel (%p556) target = $region48
        $region47: #{_lambda_.1} parent=43 // pred_region
          %p559 = scmp.lt.s32.totalorder %s24, 1
          %s560 = scalar_select %p559, %s24, 1
          %p561 = scmp.lt.s32.totalorder %s25, 0
          %s562 = scalar_select %p561, %s25, 0
          %s563 = sadd.s32 %s562, %s560
          %s564 = smul.addr %s563, 4
          %s565 = scalar_lea.vmem %s1, %s564
        $region48: #{_lambda_.1} parent=43 // pred_fallthru
          _
        // Predicated region
        $region49: #{_lambda_.1} parent=43 // pred_check
          %p566 = pneg %p112
        $region50: #{_lambda_.1} parent=43 // pred_check_branch
          %568 = sbr.rel (%p566) target = $region52
        $region51: #{_lambda_.1} parent=43 // pred_region
          %p569 = scmp.lt.s32.totalorder %s24, 1
          %s570 = scalar_select %p569, %s24, 1
          %p571 = scmp.lt.s32.totalorder %s25, 0
          %s572 = scalar_select %p571, %s25, 0
          %s573 = sadd.s32 %s572, %s570
          %s574 = smul.addr %s573, 4
          %s575 = scalar_lea.vmem %s2, %s574
        $region52: #{_lambda_.1} parent=43 // pred_fallthru
          _
        // Predicated region
        $region53: #{_lambda_.1} parent=43 // pred_check
          %p576 = pneg %p140
        $region54: #{_lambda_.1} parent=43 // pred_check_branch
          %578 = sbr.rel (%p576) target = $region56
        $region55: #{_lambda_.1} parent=43 // pred_region
          %p579 = scmp.lt.s32.totalorder %s24, 1
          %s580 = scalar_select %p579, %s24, 1
          %p581 = scmp.lt.s32.totalorder %s25, 0
          %s582 = scalar_select %p581, %s25, 0
          %s583 = sadd.s32 %s582, %s580
          %s584 = smul.addr %s583, 4
          %s585 = scalar_lea.vmem %s3, %s584
        $region56: #{_lambda_.1} parent=43 // pred_fallthru
          _
      $region44: #{_lambda_.1} parent=5 // pred_fallthru
        _
    $region6: #{_lambda_.1} parent=1 // loop_footer
      %s17 = sadd.s32 1, %s13
    $region7: #{_lambda_.1} parent=1 // loop_footer_branch
      %12 = sbr.rel target = $region3
    $region8: #{_lambda_.1} parent=1 // loop_exit
      _
    %586 = vsyncpa [#allocation3], 1
    %s587 = scalar_lea.sflag [#allocation3], 1
    %588 = vsyncpa %s587, 1

</llo_original>
